<compile_context>
chip_gen: v7x
topology: tpu7x:2x2x1
jax: 0.10.0
libtpu: 0.0.40
codegen_flags: <defaults>
</compile_context>

<pallas_src>
import functools

import jax
import jax.numpy as jnp
from jax.experimental import pallas as pl
from jax.experimental.pallas import tpu as pltpu


def _round_up(x, m):
    return ((x + m - 1) // m) * m


def _proj_kernel(x_ref, w_ref, a1_ref, a2_ref, h_ref, f1_ref, f2_ref):
    # h = x @ W for this row tile (f32 accumulate on the MXU).
    h = jnp.dot(x_ref[...], w_ref[...], preferred_element_type=jnp.float32)
    # Attention-logit halves on VPU/XLU (a1/a2 are zero beyond Fout).
    f1_ref[...] = jnp.sum(h * a1_ref[...], axis=-1, keepdims=True)
    f2_ref[...] = jnp.sum(h * a2_ref[...], axis=-1, keepdims=True)
    # Ones column in the padded tail: the attention matmul's last output
    # column then equals the e-rowsum (denominator folded onto the MXU).
    col = jax.lax.broadcasted_iota(jnp.int32, h.shape, 1)
    h_ref[...] = jnp.where(col == h.shape[1] - 1, 1.0, h).astype(jnp.bfloat16)


def _attn_kernel(nnz_ref, bq_ref, bk_ref, f1_ref, f2_ref, adj_ref, h_ref,
                 out_ref, acc_ref, *, alpha, concat, tk, h_resident):
    qi = pl.program_id(0)
    kv = pl.program_id(1)
    n_kv = pl.num_programs(1)

    @pl.when(kv == 0)
    def _init():
        acc_ref[...] = jnp.zeros_like(acc_ref)

    # Block-sparse fast path: empty adjacency tiles skip compute entirely
    # (their DMA is also skipped via the remapped block-index tables).
    @pl.when(nnz_ref[qi * n_kv + kv] > 0)
    def _compute():
        s = f1_ref[...] + f2_ref[...]               # (tq, tk) f32
        lrelu = jnp.where(s >= 0, s, alpha * s)     # LeakyReLU(negative_slope)
        # exp(-LeakyReLU(.)); exponent clamped so positions where torch would
        # overflow to inf never poison the accumulator.
        e = jnp.exp(jnp.minimum(-lrelu, 80.0))
        e = jnp.where(adj_ref[...] != 0, e, 0.0)    # keep true edges only
        if h_resident:
            k_start = pl.multiple_of(kv * tk, tk)
            h_blk = h_ref[pl.ds(k_start, tk), :]    # slice the resident copy
        else:
            h_blk = h_ref[...]
        # Last column of h is 1.0 -> acc[:, -1] accumulates the rowsum too.
        acc_ref[...] += jnp.dot(e.astype(jnp.bfloat16), h_blk,
                                preferred_element_type=jnp.float32)

    @pl.when(kv == n_kv - 1)
    def _finalize():
        acc = acc_ref[...]
        rowsum = acc[:, -1:]                        # folded-in denominator
        # Guard rowsum == 0 (isolated / padded rows) -> 0 instead of NaN.
        inv = pl.reciprocal(jnp.maximum(rowsum, 1e-20), approx=True)
        hp = acc * inv
        if concat:  # F.elu
            hp = jnp.where(hp > 0, hp, jnp.exp(jnp.minimum(hp, 0.0)) - 1.0)
        out_ref[...] = hp.astype(out_ref.dtype)


def sp_graph_attention_layer(x, adj, W, a, *, alpha, concat=True):
    """Forward of SpGraphAttentionLayer.

    x:(N,Fin), adj:(N,N) (nonzero = edge), W:(Fin,Fout), a:(1,2*Fout) -> (N,Fout) f32.
    """
    N, Fin = x.shape
    Fout = W.shape[1]
    f32 = jnp.float32

    # Reserve one extra padded column for the ones/rowsum trick.
    f_pad = _round_up(Fout + 1, 128)

    # ---- generation-aware tiling ---------------------------------------
    try:
        vmem_cap = int(pltpu.get_tpu_info().vmem_capacity_bytes)
    except Exception:
        vmem_cap = 64 * 1024 * 1024            # conservative (v7x-sized)
    big_vmem = vmem_cap >= 96 * 1024 * 1024    # v5e/v6e (128 MiB) vs v7x (64)

    if N <= 1024:
        n_pad = _round_up(N, 128)
        tq = tk = n_pad                        # single attention tile
        tr = n_pad
        vmem_limit = 40 * 1024 * 1024
    else:
        if big_vmem:
            tq, tk = 512, 2048                 # ~1 MiB int8 adj tile
            vmem_limit = 64 * 1024 * 1024
        else:
            tq, tk = 512, 1024                 # v7x: stay inside 64 MiB
            vmem_limit = 40 * 1024 * 1024
        n_pad = _round_up(N, tk)               # tq divides tk -> divides both
        tr = 512

    x_p = jnp.zeros((n_pad, Fin), f32).at[:N, :].set(x.astype(f32))
    w_p = jnp.zeros((Fin, f_pad), f32).at[:, :Fout].set(W.astype(f32))
    a1 = jnp.zeros((1, f_pad), f32).at[:, :Fout].set(a[:, :Fout].astype(f32))
    a2 = jnp.zeros((1, f_pad), f32).at[:, :Fout].set(a[:, Fout:].astype(f32))
    # int8 adjacency mask: 4x less HBM traffic than f32 for the dominant stream.
    adj_i8 = jnp.zeros((n_pad, n_pad), jnp.int8).at[:N, :N].set(
        (adj != 0).astype(jnp.int8))

    # ---- stage 1: h = x @ W, logit halves, ones column -------------------
    h_bf16, f1, f2 = pl.pallas_call(
        _proj_kernel,
        out_shape=(jax.ShapeDtypeStruct((n_pad, f_pad), jnp.bfloat16),
                   jax.ShapeDtypeStruct((n_pad, 1), f32),
                   jax.ShapeDtypeStruct((n_pad, 1), f32)),
        grid=(n_pad // tr,),
        in_specs=[pl.BlockSpec((tr, Fin), lambda i: (i, 0)),
                  pl.BlockSpec((Fin, f_pad), lambda i: (0, 0)),
                  pl.BlockSpec((1, f_pad), lambda i: (0, 0)),
                  pl.BlockSpec((1, f_pad), lambda i: (0, 0))],
        out_specs=(pl.BlockSpec((tr, f_pad), lambda i: (i, 0)),
                   pl.BlockSpec((tr, 1), lambda i: (i, 0)),
                   pl.BlockSpec((tr, 1), lambda i: (i, 0))),
        compiler_params=pltpu.CompilerParams(
            dimension_semantics=("parallel",),
            vmem_limit_bytes=vmem_limit),
    )(x_p, w_p, a1, a2)

    # kv-side logits lane-major (wrapper-side layout plumbing, tiny).
    f2_row = f2.reshape(1, n_pad)

    # ---- block-sparsity tables (skip compute AND adj DMA for empty tiles) --
    nq, nk = n_pad // tq, n_pad // tk
    blk_nnz = adj_i8.astype(jnp.int32).reshape(nq, tq, nk, tk).sum(
        axis=(1, 3)).reshape(-1)                       # flat (nq*nk,) int32
    steps = jnp.arange(nq * nk, dtype=jnp.int32)
    # For empty blocks, repeat the last nonzero block index so consecutive
    # grid steps see an unchanged index and Pallas skips re-issuing the DMA.
    last_nz = jax.lax.cummax(jnp.where(blk_nnz > 0, steps, -1), axis=0)
    remap = jnp.where(last_nz >= 0, last_nz, steps)
    blk_q = (remap // nk).astype(jnp.int32)
    blk_k = (remap % nk).astype(jnp.int32)

    # Keep h VMEM-resident (single DMA) if it fits; else stream per kv tile.
    h_resident = (n_pad * f_pad * 2) * 2 <= 16 * 1024 * 1024
    if h_resident:
        h_spec = pl.BlockSpec((n_pad, f_pad), lambda i, k, nnz, bq, bk: (0, 0))
    else:
        h_spec = pl.BlockSpec(
            (tk, f_pad), lambda i, k, nnz, bq, bk: (bk[i * nk + k], 0))

    cost = pl.CostEstimate(
        flops=int(2 * n_pad * n_pad * f_pad + 6 * n_pad * n_pad),
        transcendentals=int(n_pad * n_pad),
        bytes_accessed=int(n_pad * n_pad              # int8 adjacency stream
                           + n_pad * f_pad * 2        # h (resident: once)
                           + n_pad * f_pad * 4))      # output

    kernel = functools.partial(_attn_kernel, alpha=float(alpha),
                               concat=concat, tk=tk, h_resident=h_resident)
    out_p = pl.pallas_call(
        kernel,
        out_shape=jax.ShapeDtypeStruct((n_pad, f_pad), f32),
        grid_spec=pltpu.PrefetchScalarGridSpec(
            num_scalar_prefetch=3,
            grid=(nq, nk),                                        # kv axis last
            in_specs=[
                pl.BlockSpec((tq, 1), lambda i, k, nnz, bq, bk: (i, 0)),   # f1
                pl.BlockSpec((1, tk), lambda i, k, nnz, bq, bk: (0, k)),   # f2
                pl.BlockSpec((tq, tk),                                     # adj
                             lambda i, k, nnz, bq, bk: (bq[i * nk + k],
                                                        bk[i * nk + k])),
                h_spec,                                                    # h
            ],
            out_specs=pl.BlockSpec((tq, f_pad),
                                   lambda i, k, nnz, bq, bk: (i, 0)),
            scratch_shapes=[pltpu.VMEM((tq, f_pad), f32)],   # e @ [h|1] acc
        ),
        compiler_params=pltpu.CompilerParams(
            dimension_semantics=("parallel", "arbitrary"),
            vmem_limit_bytes=vmem_limit),
        cost_estimate=cost,
    )(blk_nnz, blk_q, blk_k, f1, f2_row, adj_i8, h_bf16)

    return out_p[:N, :Fout]


if __name__ == "__main__":
    key = jax.random.PRNGKey(0)
    N, Fin, Fout = 16, 8, 8
    alpha = 0.2
    k1, k2, k3, k4 = jax.random.split(key, 4)

    # xavier_normal_(gain=1.414): std = gain * sqrt(2 / (fan_in + fan_out))
    w_std = 1.414 * (2.0 / (Fin + Fout)) ** 0.5
    a_std = 1.414 * (2.0 / (1 + 2 * Fout)) ** 0.5
    W = jax.random.normal(k1, (Fin, Fout), jnp.float32) * w_std
    a = jax.random.normal(k2, (1, 2 * Fout), jnp.float32) * a_std

    x = jax.random.normal(k3, (N, Fin), jnp.float32)
    adj = (jax.random.uniform(k4, (N, N)) < 0.3).astype(jnp.float32)
    adj = jnp.maximum(adj, jnp.eye(N, dtype=jnp.float32))  # self loops -> rowsum > 0

    out = sp_graph_attention_layer(x, adj, W, a, alpha=alpha, concat=True)
    out = jax.block_until_ready(out)

    # pure-JAX f32 reference (dense masked formulation of the same math)
    h = x @ W
    s = h @ a[:, :Fout].T + (h @ a[:, Fout:].T).T
    e = jnp.where(adj != 0, jnp.exp(-jnp.where(s >= 0, s, alpha * s)), 0.0)
    hp = (e @ h) / jnp.sum(e, axis=1, keepdims=True)
    ref = jnp.where(hp > 0, hp, jnp.exp(hp) - 1.0)
    err = float(jnp.max(jnp.abs(out - ref)))
    assert jnp.allclose(out, ref, atol=2e-2, rtol=2e-2), err

    print("KERNEL_OK")
</pallas_src>

<mosaic_0001>
module attributes {stable_mosaic.version = 11 : i64} {
  func.func @_proj_kernel(%arg0: i32, %arg1: memref<128x8xf32, #tpu.memory_space<vmem>>, %arg2: memref<8x128xf32, #tpu.memory_space<vmem>>, %arg3: memref<1x128xf32, #tpu.memory_space<vmem>>, %arg4: memref<1x128xf32, #tpu.memory_space<vmem>>, %arg5: memref<128x128xbf16, #tpu.memory_space<vmem>>, %arg6: memref<128x1xf32, #tpu.memory_space<vmem>>, %arg7: memref<128x1xf32, #tpu.memory_space<vmem>>) attributes {dimension_semantics = [#tpu.dimension_semantics<parallel>], iteration_bounds = array<i64: 1>, scalar_prefetch = 0 : i64, scratch_operands = 0 : i64, tpu.core_type = #tpu.core_type<tc>, window_params = [{transform_indices = @transform_0, window_bounds = array<i64: 128, 8>}, {pipeline_mode = #tpu.pipeline_mode<synchronous>, transform_indices = @transform_1, window_bounds = array<i64: 8, 128>}, {pipeline_mode = #tpu.pipeline_mode<synchronous>, transform_indices = @transform_2, window_bounds = array<i64: 1, 128>}, {pipeline_mode = #tpu.pipeline_mode<synchronous>, transform_indices = @transform_3, window_bounds = array<i64: 1, 128>}, {transform_indices = @transform_4, window_bounds = array<i64: 128, 128>}, {transform_indices = @transform_5, window_bounds = array<i64: 128, 1>}, {transform_indices = @transform_6, window_bounds = array<i64: 128, 1>}]} {
    %c0 = arith.constant 0 : index
    %c0_0 = arith.constant 0 : index
    %0 = vector.load %arg1[%c0, %c0_0] : memref<128x8xf32, #tpu.memory_space<vmem>>, vector<128x8xf32>
    %c0_1 = arith.constant 0 : index
    %c0_2 = arith.constant 0 : index
    %1 = vector.load %arg2[%c0_1, %c0_2] : memref<8x128xf32, #tpu.memory_space<vmem>>, vector<8x128xf32>
    %cst = arith.constant dense<0.000000e+00> : vector<128x128xf32>
    %2 = tpu.matmul %0, %1, %cst {dimension_numbers = #tpu.dot_dimension_numbers<[1], [0], [0], [1], [0, 0, 1, 1], [], []>} : vector<128x8xf32>, vector<8x128xf32>, vector<128x128xf32> -> vector<128x128xf32>
    %c0_3 = arith.constant 0 : index
    %c0_4 = arith.constant 0 : index
    %3 = vector.load %arg3[%c0_3, %c0_4] : memref<1x128xf32, #tpu.memory_space<vmem>>, vector<1x128xf32>
    %4 = vector.broadcast %3 : vector<1x128xf32> to vector<128x128xf32>
    %5 = arith.mulf %2, %4 : vector<128x128xf32>
    %cst_5 = arith.constant dense<0.000000e+00> : vector<128xf32>
    %6 = vector.multi_reduction <add>, %5, %cst_5 [1] : vector<128x128xf32> to vector<128xf32>
    %7 = vector.shape_cast %6 : vector<128xf32> to vector<128x1xf32>
    %c0_6 = arith.constant 0 : index
    %c0_7 = arith.constant 0 : index
    %8 = vector.load %arg6[%c0_6, %c0_7] : memref<128x1xf32, #tpu.memory_space<vmem>>, vector<128x1xf32>
    tpu.vector_store %arg6[%c0_6, %c0_7], %7 {strides = array<i32>} : memref<128x1xf32, #tpu.memory_space<vmem>>, vector<128x1xf32>,
    %c0_8 = arith.constant 0 : index
    %c0_9 = arith.constant 0 : index
    %9 = vector.load %arg4[%c0_8, %c0_9] : memref<1x128xf32, #tpu.memory_space<vmem>>, vector<1x128xf32>
    %10 = vector.broadcast %9 : vector<1x128xf32> to vector<128x128xf32>
    %11 = arith.mulf %2, %10 : vector<128x128xf32>
    %cst_10 = arith.constant dense<0.000000e+00> : vector<128xf32>
    %12 = vector.multi_reduction <add>, %11, %cst_10 [1] : vector<128x128xf32> to vector<128xf32>
    %13 = vector.shape_cast %12 : vector<128xf32> to vector<128x1xf32>
    %c0_11 = arith.constant 0 : index
    %c0_12 = arith.constant 0 : index
    %14 = vector.load %arg7[%c0_11, %c0_12] : memref<128x1xf32, #tpu.memory_space<vmem>>, vector<128x1xf32>
    tpu.vector_store %arg7[%c0_11, %c0_12], %13 {strides = array<i32>} : memref<128x1xf32, #tpu.memory_space<vmem>>, vector<128x1xf32>,
    %15 = tpu.iota {dimensions = array<i32: 1>} : vector<128x128xi32>
    %c127_i32 = arith.constant 127 : i32
    %16 = vector.broadcast %c127_i32 : i32 to vector<128x128xi32>
    %17 = arith.cmpi eq, %15, %16 : vector<128x128xi32>
    %cst_13 = arith.constant 1.000000e+00 : f32
    %18 = vector.broadcast %cst_13 : f32 to vector<128x128xf32>
    %19 = arith.select %17, %18, %2 : vector<128x128xi1>, vector<128x128xf32>
    %20 = arith.truncf %19 : vector<128x128xf32> to vector<128x128xbf16>
    %c0_14 = arith.constant 0 : index
    %c0_15 = arith.constant 0 : index
    %21 = vector.load %arg5[%c0_14, %c0_15] : memref<128x128xbf16, #tpu.memory_space<vmem>>, vector<128x128xbf16>
    tpu.vector_store %arg5[%c0_14, %c0_15], %20 {strides = array<i32>} : memref<128x128xbf16, #tpu.memory_space<vmem>>, vector<128x128xbf16>,
    return
  }
  func.func @transform_0(%arg0: i32) -> (i32, i32) {
    %c0_i32 = arith.constant 0 : i32
    %c0_i32_0 = arith.constant 0 : i32
    return %arg0, %c0_i32 : i32, i32
  }
  func.func @transform_1(%arg0: i32) -> (i32, i32) {
    %c0_i32 = arith.constant 0 : i32
    %c0_i32_0 = arith.constant 0 : i32
    %c0_i32_1 = arith.constant 0 : i32
    return %c0_i32, %c0_i32_0 : i32, i32
  }
  func.func @transform_2(%arg0: i32) -> (i32, i32) {
    %c0_i32 = arith.constant 0 : i32
    %c0_i32_0 = arith.constant 0 : i32
    %c0_i32_1 = arith.constant 0 : i32
    return %c0_i32, %c0_i32_0 : i32, i32
  }
  func.func @transform_3(%arg0: i32) -> (i32, i32) {
    %c0_i32 = arith.constant 0 : i32
    %c0_i32_0 = arith.constant 0 : i32
    %c0_i32_1 = arith.constant 0 : i32
    return %c0_i32, %c0_i32_0 : i32, i32
  }
  func.func @transform_4(%arg0: i32) -> (i32, i32) {
    %c0_i32 = arith.constant 0 : i32
    %c0_i32_0 = arith.constant 0 : i32
    return %arg0, %c0_i32 : i32, i32
  }
  func.func @transform_5(%arg0: i32) -> (i32, i32) {
    %c0_i32 = arith.constant 0 : i32
    %c0_i32_0 = arith.constant 0 : i32
    return %arg0, %c0_i32 : i32, i32
  }
  func.func @transform_6(%arg0: i32) -> (i32, i32) {
    %c0_i32 = arith.constant 0 : i32
    %c0_i32_0 = arith.constant 0 : i32
    return %arg0, %c0_i32 : i32, i32
  }
}

</mosaic_0001>

<llo_original>
// kernel: tpu_custom_call.1
$region0: #{tpu_custom_call.1}
  #allocation0 [shape = 'u32[]', space=smem, size = 0x4, offset = 0x4, fixed_abs, tag = 'smem constant byte address 0x4 - core index']
  #allocation1 [shape = 'u32[144,128]{1,0:T(1,128)}', space=vmem, size = 0x12000, scoped, tag = 'internal scratch']
  %s0 = inlined_call_operand.vmem [shape: f32[128,8], index: 0, kind: input, shape index: {}]
  %s1 = inlined_call_operand.vmem [shape: f32[8,128], index: 1, kind: input, shape index: {}]
  %s2 = inlined_call_operand.vmem [shape: f32[1,128], index: 2, kind: input, shape index: {}]
  %s3 = inlined_call_operand.vmem [shape: f32[1,128], index: 3, kind: input, shape index: {}]
  %s4 = inlined_call_operand.hbm [shape: bf16[128,128], index: 4, kind: output, shape index: {0}]
  %s5 = inlined_call_operand.vmem [shape: f32[128,1], index: 5, kind: output, shape index: {1}]
  %s6 = inlined_call_operand.vmem [shape: f32[128,1], index: 6, kind: output, shape index: {2}]
  %7 = xla_tuple %s4, %s5, %s6
  %s8 = sld [smem:[#allocation0]]
  $region42: #{tpu_custom_call.1} parent=0
    _
  %s10 = ssub.s32 1, %s8
  %s11 = scalar_select 0, %s10, %s8
  $region1: #{tpu_custom_call.1} parent=0
    #allocation2 [shape = 'u8[32768]{0}', space=vmem, size = 0x8000, scoped, tag = 'output window, operand 0, single buffered']
    #allocation3 [shape = 's32[1]{0}', space=sflag, size = 0x4, scoped, tag = 'scoped memory for tpu_custom_call.1']
    %12 = vsyncpa [#allocation3], 0
    // Predicated region
    $region2: #{tpu_custom_call.1} parent=1 // pred_check
      _
    $region3: #{tpu_custom_call.1} parent=1 // pred_check_branch
      %14 = sbr.rel (0) target = $region5
    $region4: #{tpu_custom_call.1} parent=1 // pred_region
      _
    $region5: #{tpu_custom_call.1} parent=1 // pred_fallthru
      _
    // Predicated region
    $region6: #{tpu_custom_call.1} parent=1 // pred_check
      _
    $region7: #{tpu_custom_call.1} parent=1 // pred_check_branch
      %16 = sbr.rel (0) target = $region9
    $region8: #{tpu_custom_call.1} parent=1 // pred_region
      _
    $region9: #{tpu_custom_call.1} parent=1 // pred_fallthru
      _
    // Predicated region
    $region10: #{tpu_custom_call.1} parent=1 // pred_check
      _
    $region11: #{tpu_custom_call.1} parent=1 // pred_check_branch
      %18 = sbr.rel (0) target = $region13
    $region12: #{tpu_custom_call.1} parent=1 // pred_region
      _
    $region13: #{tpu_custom_call.1} parent=1 // pred_fallthru
      _
    // Predicated region
    $region14: #{tpu_custom_call.1} parent=1 // pred_check
      _
    $region15: #{tpu_custom_call.1} parent=1 // pred_check_branch
      %20 = sbr.rel (0) target = $region17
    $region16: #{tpu_custom_call.1} parent=1 // pred_region
      _
    $region17: #{tpu_custom_call.1} parent=1 // pred_fallthru
      _
    %v21 = vld [vmem:[%s0] sm:$0xff]
    %v22 = vld [vmem:[%s0 + $0x8] sm:$0xff]
    %v23 = vld [vmem:[%s0 + $0x10] sm:$0xff]
    %v24 = vld [vmem:[%s0 + $0x18] sm:$0xff]
    %v25 = vld [vmem:[%s0 + $0x20] sm:$0xff]
    %v26 = vld [vmem:[%s0 + $0x28] sm:$0xff]
    %v27 = vld [vmem:[%s0 + $0x30] sm:$0xff]
    %v28 = vld [vmem:[%s0 + $0x38] sm:$0xff]
    %v29 = vld [vmem:[%s0 + $0x40] sm:$0xff]
    %v30 = vld [vmem:[%s0 + $0x48] sm:$0xff]
    %v31 = vld [vmem:[%s0 + $0x50] sm:$0xff]
    %v32 = vld [vmem:[%s0 + $0x58] sm:$0xff]
    %v33 = vld [vmem:[%s0 + $0x60] sm:$0xff]
    %v34 = vld [vmem:[%s0 + $0x68] sm:$0xff]
    %v35 = vld [vmem:[%s0 + $0x70] sm:$0xff]
    %v36 = vld [vmem:[%s0 + $0x78] sm:$0xff]
    %v37 = vld [vmem:[%s1] sm:$0xff]
    %vm38 = vcmask 64512
    %v40 = vsel %vm38, %v21, 0
    %v43 = vsel %vm38, %v22, 0
    %v46 = vsel %vm38, %v23, 0
    %v49 = vsel %vm38, %v24, 0
    %v52 = vsel %vm38, %v25, 0
    %v55 = vsel %vm38, %v26, 0
    %v58 = vsel %vm38, %v27, 0
    %v61 = vsel %vm38, %v28, 0
    %v64 = vsel %vm38, %v29, 0
    %v67 = vsel %vm38, %v30, 0
    %v70 = vsel %vm38, %v31, 0
    %v73 = vsel %vm38, %v32, 0
    %v76 = vsel %vm38, %v33, 0
    %v79 = vsel %vm38, %v34, 0
    %v82 = vsel %vm38, %v35, 0
    %v85 = vsel %vm38, %v36, 0
    %87 = vmatprep.subr.mxu0 0.0
    %88 = vmatpush1.msra.mxu0 %v37
    %89 = vmatprep.subr.mxu0 0.0
    %90 = vmatpush1.msra.mxu0 0.0
    %91 = vmatprep.subr.mxu0 0.0
    %92 = vmatpush1.msra.mxu0 0.0
    %93 = vmatprep.subr.mxu0 0.0
    %94 = vmatpush1.msra.mxu0 0.0
    %95 = vmatprep.subr.mxu0 0.0
    %96 = vmatpush1.msra.mxu0 0.0
    %97 = vmatprep.subr.mxu0 0.0
    %98 = vmatpush1.msra.mxu0 0.0
    %99 = vmatprep.subr.mxu0 0.0
    %100 = vmatpush1.msra.mxu0 0.0
    %101 = vmatprep.subr.mxu0 0.0
    %102 = vmatpush1.msra.mxu0 0.0
    %103 = vmatprep.subr.mxu0 0.0
    %104 = vmatpush1.msra.mxu0 0.0
    %105 = vmatprep.subr.mxu0 0.0
    %106 = vmatpush1.msra.mxu0 0.0
    %107 = vmatprep.subr.mxu0 0.0
    %108 = vmatpush1.msra.mxu0 0.0
    %109 = vmatprep.subr.mxu0 0.0
    %110 = vmatpush1.msra.mxu0 0.0
    %111 = vmatprep.subr.mxu0 0.0
    %112 = vmatpush1.msra.mxu0 0.0
    %113 = vmatprep.subr.mxu0 0.0
    %114 = vmatpush1.msra.mxu0 0.0
    %115 = vmatprep.subr.mxu0 0.0
    %116 = vmatpush1.msra.mxu0 0.0
    %117 = vmatprep.subr.mxu0 0.0
    %118 = vmatpush1.msra.mxu0 0.0
    %119 = vmatprep.subr.mxu0 0.0
    %120 = vmatpush1.msra.mxu0 0.0
    %121 = vmatprep.subr.mxu0 0.0
    %122 = vmatpush1.msra.mxu0 0.0
    %123 = vmatprep.subr.mxu0 0.0
    %124 = vmatpush1.msra.mxu0 0.0
    %125 = vmatprep.subr.mxu0 0.0
    %126 = vmatpush1.msra.mxu0 0.0
    %127 = vmatprep.subr.mxu0 0.0
    %128 = vmatpush1.msra.mxu0 0.0
    %129 = vmatprep.subr.mxu0 0.0
    %130 = vmatpush1.msra.mxu0 0.0
    %131 = vmatprep.subr.mxu0 0.0
    %132 = vmatpush1.msra.mxu0 0.0
    %133 = vmatprep.subr.mxu0 0.0
    %134 = vmatpush1.msra.mxu0 0.0
    %135 = vmatprep.subr.mxu0 0.0
    %136 = vmatpush1.msra.mxu0 0.0
    %137 = vmatprep.subr.mxu0 0.0
    %138 = vmatpush1.msra.mxu0 0.0
    %139 = vmatprep.subr.mxu0 0.0
    %140 = vmatpush1.msra.mxu0 0.0
    %141 = vmatprep.subr.mxu0 0.0
    %142 = vmatpush1.msra.mxu0 0.0
    %143 = vmatprep.subr.mxu0 0.0
    %144 = vmatpush1.msra.mxu0 0.0
    %145 = vmatprep.subr.mxu0 0.0
    %146 = vmatpush1.msra.mxu0 0.0
    %147 = vmatprep.subr.mxu0 0.0
    %148 = vmatpush1.msra.mxu0 0.0
    %149 = vmatprep.subr.mxu0 0.0
    %150 = vmatpush1.msra.mxu0 0.0
    %151 = vmatprep.mubr.f32.mxu0 0.0
    %152 = vmatmul.mubr.f32.gmra.mrb[0].mxu0 %v40
    %v153 = vpop.f32.mrb[0].mxu0
    %v154 = vadd.f32 0.0, %v153
    %v155 = vpop.f32.mrb[0].mxu0
    %156 = vmatprep.mubr.f32.mxu0 0.0
    %157 = vmatmul.mubr.f32.gmra.mrb[0].mxu0 %v43
    %v158 = vpop.f32.mrb[0].mxu0
    %v159 = vadd.f32 0.0, %v158
    %v160 = vpop.f32.mrb[0].mxu0
    %161 = vmatprep.mubr.f32.mxu0 0.0
    %162 = vmatmul.mubr.f32.gmra.mrb[0].mxu0 %v46
    %v163 = vpop.f32.mrb[0].mxu0
    %v164 = vadd.f32 0.0, %v163
    %v165 = vpop.f32.mrb[0].mxu0
    %166 = vmatprep.mubr.f32.mxu0 0.0
    %167 = vmatmul.mubr.f32.gmra.mrb[0].mxu0 %v49
    %v168 = vpop.f32.mrb[0].mxu0
    %v169 = vadd.f32 0.0, %v168
    %v170 = vpop.f32.mrb[0].mxu0
    %171 = vmatprep.mubr.f32.mxu0 0.0
    %172 = vmatmul.mubr.f32.gmra.mrb[0].mxu0 %v52
    %v173 = vpop.f32.mrb[0].mxu0
    %v174 = vadd.f32 0.0, %v173
    %v175 = vpop.f32.mrb[0].mxu0
    %176 = vmatprep.mubr.f32.mxu0 0.0
    %177 = vmatmul.mubr.f32.gmra.mrb[0].mxu0 %v55
    %v178 = vpop.f32.mrb[0].mxu0
    %v179 = vadd.f32 0.0, %v178
    %v180 = vpop.f32.mrb[0].mxu0
    %181 = vmatprep.mubr.f32.mxu0 0.0
    %182 = vmatmul.mubr.f32.gmra.mrb[0].mxu0 %v58
    %v183 = vpop.f32.mrb[0].mxu0
    %v184 = vadd.f32 0.0, %v183
    %v185 = vpop.f32.mrb[0].mxu0
    %186 = vmatprep.mubr.f32.mxu0 0.0
    %187 = vmatmul.mubr.f32.gmra.mrb[0].mxu0 %v61
    %v188 = vpop.f32.mrb[0].mxu0
    %v189 = vadd.f32 0.0, %v188
    %v190 = vpop.f32.mrb[0].mxu0
    %191 = vmatprep.mubr.f32.mxu0 0.0
    %192 = vmatmul.mubr.f32.gmra.mrb[0].mxu0 %v64
    %v193 = vpop.f32.mrb[0].mxu0
    %v194 = vadd.f32 0.0, %v193
    %v195 = vpop.f32.mrb[0].mxu0
    %196 = vmatprep.mubr.f32.mxu0 0.0
    %197 = vmatmul.mubr.f32.gmra.mrb[0].mxu0 %v67
    %v198 = vpop.f32.mrb[0].mxu0
    %v199 = vadd.f32 0.0, %v198
    %v200 = vpop.f32.mrb[0].mxu0
    %201 = vmatprep.mubr.f32.mxu0 0.0
    %202 = vmatmul.mubr.f32.gmra.mrb[0].mxu0 %v70
    %v203 = vpop.f32.mrb[0].mxu0
    %v204 = vadd.f32 0.0, %v203
    %v205 = vpop.f32.mrb[0].mxu0
    %206 = vmatprep.mubr.f32.mxu0 0.0
    %207 = vmatmul.mubr.f32.gmra.mrb[0].mxu0 %v73
    %v208 = vpop.f32.mrb[0].mxu0
    %v209 = vadd.f32 0.0, %v208
    %v210 = vpop.f32.mrb[0].mxu0
    %211 = vmatprep.mubr.f32.mxu0 0.0
    %212 = vmatmul.mubr.f32.gmra.mrb[0].mxu0 %v76
    %v213 = vpop.f32.mrb[0].mxu0
    %v214 = vadd.f32 0.0, %v213
    %v215 = vpop.f32.mrb[0].mxu0
    %216 = vmatprep.mubr.f32.mxu0 0.0
    %217 = vmatmul.mubr.f32.gmra.mrb[0].mxu0 %v79
    %v218 = vpop.f32.mrb[0].mxu0
    %v219 = vadd.f32 0.0, %v218
    %v220 = vpop.f32.mrb[0].mxu0
    %221 = vmatprep.mubr.f32.mxu0 0.0
    %222 = vmatmul.mubr.f32.gmra.mrb[0].mxu0 %v82
    %v223 = vpop.f32.mrb[0].mxu0
    %v224 = vadd.f32 0.0, %v223
    %v225 = vpop.f32.mrb[0].mxu0
    %226 = vmatprep.mubr.f32.mxu0 0.0
    %227 = vmatmul.mubr.f32.gmra.mrb[0].mxu0 %v85
    %v228 = vpop.f32.mrb[0].mxu0
    %v229 = vadd.f32 0.0, %v228
    %v230 = vpop.f32.mrb[0].mxu0
    %231 = vdwg.mxu0
    %v232 = vld [vmem:[%s2] sm:$0x1]
    %v234 = vlaneseq
    %v235 = vshrl.u32 %v234, 7
    %v236 = vsub.s32 0, %v235
    %v237 = vrot.slane %v232, %v236
    %v239 = vmul.f32 %v154, %v237
    %v240 = vmul.f32 %v159, %v237
    %v241 = vmul.f32 %v164, %v237
    %v242 = vmul.f32 %v169, %v237
    %v243 = vmul.f32 %v174, %v237
    %v244 = vmul.f32 %v179, %v237
    %v245 = vmul.f32 %v184, %v237
    %v246 = vmul.f32 %v189, %v237
    %v247 = vmul.f32 %v194, %v237
    %v248 = vmul.f32 %v199, %v237
    %v249 = vmul.f32 %v204, %v237
    %v250 = vmul.f32 %v209, %v237
    %v251 = vmul.f32 %v214, %v237
    %v252 = vmul.f32 %v219, %v237
    %v253 = vmul.f32 %v224, %v237
    %v254 = vmul.f32 %v229, %v237
    %255 = vadd.xlane.f32.xlu0 %v239
    %v256 = vpop.xlane.xlu0 %255
    %257 = vadd.xlane.f32.xlu0 %v240
    %v258 = vpop.xlane.xlu0 %257
    %259 = vadd.xlane.f32.xlu0 %v241
    %v260 = vpop.xlane.xlu0 %259
    %261 = vadd.xlane.f32.xlu0 %v242
    %v262 = vpop.xlane.xlu0 %261
    %263 = vadd.xlane.f32.xlu0 %v243
    %v264 = vpop.xlane.xlu0 %263
    %265 = vadd.xlane.f32.xlu0 %v244
    %v266 = vpop.xlane.xlu0 %265
    %267 = vadd.xlane.f32.xlu0 %v245
    %v268 = vpop.xlane.xlu0 %267
    %269 = vadd.xlane.f32.xlu0 %v246
    %v270 = vpop.xlane.xlu0 %269
    %271 = vadd.xlane.f32.xlu0 %v247
    %v272 = vpop.xlane.xlu0 %271
    %273 = vadd.xlane.f32.xlu0 %v248
    %v274 = vpop.xlane.xlu0 %273
    %275 = vadd.xlane.f32.xlu0 %v249
    %v276 = vpop.xlane.xlu0 %275
    %277 = vadd.xlane.f32.xlu0 %v250
    %v278 = vpop.xlane.xlu0 %277
    %279 = vadd.xlane.f32.xlu0 %v251
    %v280 = vpop.xlane.xlu0 %279
    %281 = vadd.xlane.f32.xlu0 %v252
    %v282 = vpop.xlane.xlu0 %281
    %283 = vadd.xlane.f32.xlu0 %v253
    %v284 = vpop.xlane.xlu0 %283
    %285 = vadd.xlane.f32.xlu0 %v254
    %v286 = vpop.xlane.xlu0 %285
    %vm287 = vcmask 7168
    %288 = vst.msk [vmem:[%s5] sm:$0xff] %vm287, %v256
    %289 = vst.msk [vmem:[%s5 + $0x8] sm:$0xff] %vm287, %v258
    %290 = vst.msk [vmem:[%s5 + $0x10] sm:$0xff] %vm287, %v260
    %291 = vst.msk [vmem:[%s5 + $0x18] sm:$0xff] %vm287, %v262
    %292 = vst.msk [vmem:[%s5 + $0x20] sm:$0xff] %vm287, %v264
    %293 = vst.msk [vmem:[%s5 + $0x28] sm:$0xff] %vm287, %v266
    %294 = vst.msk [vmem:[%s5 + $0x30] sm:$0xff] %vm287, %v268
    %295 = vst.msk [vmem:[%s5 + $0x38] sm:$0xff] %vm287, %v270
    %296 = vst.msk [vmem:[%s5 + $0x40] sm:$0xff] %vm287, %v272
    %297 = vst.msk [vmem:[%s5 + $0x48] sm:$0xff] %vm287, %v274
    %298 = vst.msk [vmem:[%s5 + $0x50] sm:$0xff] %vm287, %v276
    %299 = vst.msk [vmem:[%s5 + $0x58] sm:$0xff] %vm287, %v278
    %300 = vst.msk [vmem:[%s5 + $0x60] sm:$0xff] %vm287, %v280
    %301 = vst.msk [vmem:[%s5 + $0x68] sm:$0xff] %vm287, %v282
    %302 = vst.msk [vmem:[%s5 + $0x70] sm:$0xff] %vm287, %v284
    %303 = vst.msk [vmem:[%s5 + $0x78] sm:$0xff] %vm287, %v286
    %v304 = vld [vmem:[%s3] sm:$0x1]
    %v306 = vlaneseq
    %v307 = vshrl.u32 %v306, 7
    %v308 = vsub.s32 0, %v307
    %v309 = vrot.slane %v304, %v308
    %v311 = vmul.f32 %v154, %v309
    %v312 = vmul.f32 %v159, %v309
    %v313 = vmul.f32 %v164, %v309
    %v314 = vmul.f32 %v169, %v309
    %v315 = vmul.f32 %v174, %v309
    %v316 = vmul.f32 %v179, %v309
    %v317 = vmul.f32 %v184, %v309
    %v318 = vmul.f32 %v189, %v309
    %v319 = vmul.f32 %v194, %v309
    %v320 = vmul.f32 %v199, %v309
    %v321 = vmul.f32 %v204, %v309
    %v322 = vmul.f32 %v209, %v309
    %v323 = vmul.f32 %v214, %v309
    %v324 = vmul.f32 %v219, %v309
    %v325 = vmul.f32 %v224, %v309
    %v326 = vmul.f32 %v229, %v309
    %327 = vadd.xlane.f32.xlu0 %v311
    %v328 = vpop.xlane.xlu0 %327
    %329 = vadd.xlane.f32.xlu0 %v312
    %v330 = vpop.xlane.xlu0 %329
    %331 = vadd.xlane.f32.xlu0 %v313
    %v332 = vpop.xlane.xlu0 %331
    %333 = vadd.xlane.f32.xlu0 %v314
    %v334 = vpop.xlane.xlu0 %333
    %335 = vadd.xlane.f32.xlu0 %v315
    %v336 = vpop.xlane.xlu0 %335
    %337 = vadd.xlane.f32.xlu0 %v316
    %v338 = vpop.xlane.xlu0 %337
    %339 = vadd.xlane.f32.xlu0 %v317
    %v340 = vpop.xlane.xlu0 %339
    %341 = vadd.xlane.f32.xlu0 %v318
    %v342 = vpop.xlane.xlu0 %341
    %343 = vadd.xlane.f32.xlu0 %v319
    %v344 = vpop.xlane.xlu0 %343
    %345 = vadd.xlane.f32.xlu0 %v320
    %v346 = vpop.xlane.xlu0 %345
    %347 = vadd.xlane.f32.xlu0 %v321
    %v348 = vpop.xlane.xlu0 %347
    %349 = vadd.xlane.f32.xlu0 %v322
    %v350 = vpop.xlane.xlu0 %349
    %351 = vadd.xlane.f32.xlu0 %v323
    %v352 = vpop.xlane.xlu0 %351
    %353 = vadd.xlane.f32.xlu0 %v324
    %v354 = vpop.xlane.xlu0 %353
    %355 = vadd.xlane.f32.xlu0 %v325
    %v356 = vpop.xlane.xlu0 %355
    %357 = vadd.xlane.f32.xlu0 %v326
    %v358 = vpop.xlane.xlu0 %357
    %359 = vst.msk [vmem:[%s6] sm:$0xff] %vm287, %v328
    %360 = vst.msk [vmem:[%s6 + $0x8] sm:$0xff] %vm287, %v330
    %361 = vst.msk [vmem:[%s6 + $0x10] sm:$0xff] %vm287, %v332
    %362 = vst.msk [vmem:[%s6 + $0x18] sm:$0xff] %vm287, %v334
    %363 = vst.msk [vmem:[%s6 + $0x20] sm:$0xff] %vm287, %v336
    %364 = vst.msk [vmem:[%s6 + $0x28] sm:$0xff] %vm287, %v338
    %365 = vst.msk [vmem:[%s6 + $0x30] sm:$0xff] %vm287, %v340
    %366 = vst.msk [vmem:[%s6 + $0x38] sm:$0xff] %vm287, %v342
    %367 = vst.msk [vmem:[%s6 + $0x40] sm:$0xff] %vm287, %v344
    %368 = vst.msk [vmem:[%s6 + $0x48] sm:$0xff] %vm287, %v346
    %369 = vst.msk [vmem:[%s6 + $0x50] sm:$0xff] %vm287, %v348
    %370 = vst.msk [vmem:[%s6 + $0x58] sm:$0xff] %vm287, %v350
    %371 = vst.msk [vmem:[%s6 + $0x60] sm:$0xff] %vm287, %v352
    %372 = vst.msk [vmem:[%s6 + $0x68] sm:$0xff] %vm287, %v354
    %373 = vst.msk [vmem:[%s6 + $0x70] sm:$0xff] %vm287, %v356
    %374 = vst.msk [vmem:[%s6 + $0x78] sm:$0xff] %vm287, %v358
    %v375 = vlaneseq
    %v376 = vand.u32 %v375, 127
    %vm377 = vcmp.eq.s32.totalorder %v376, 127
    %v378 = vsel %vm377, 1.0, %v154
    %v379 = vsel %vm377, 1.0, %v159
    %v380 = vsel %vm377, 1.0, %v164
    %v381 = vsel %vm377, 1.0, %v169
    %v382 = vsel %vm377, 1.0, %v174
    %v383 = vsel %vm377, 1.0, %v179
    %v384 = vsel %vm377, 1.0, %v184
    %v385 = vsel %vm377, 1.0, %v189
    %v386 = vsel %vm377, 1.0, %v194
    %v387 = vsel %vm377, 1.0, %v199
    %v388 = vsel %vm377, 1.0, %v204
    %v389 = vsel %vm377, 1.0, %v209
    %v390 = vsel %vm377, 1.0, %v214
    %v391 = vsel %vm377, 1.0, %v219
    %v392 = vsel %vm377, 1.0, %v224
    %v393 = vsel %vm377, 1.0, %v229
    %v394 = vpack.c.bf16 %v379, %v378
    %v395 = vpack.c.bf16 %v381, %v380
    %v396 = vpack.c.bf16 %v383, %v382
    %v397 = vpack.c.bf16 %v385, %v384
    %v398 = vpack.c.bf16 %v387, %v386
    %v399 = vpack.c.bf16 %v389, %v388
    %v400 = vpack.c.bf16 %v391, %v390
    %v401 = vpack.c.bf16 %v393, %v392
    %v410 = vunpack.c.l.b16 %v394
    %v411 = vunpack.c.h.b16 %v394
    %v412 = vunpack.c.l.b16 %v395
    %v413 = vunpack.c.h.b16 %v395
    %v414 = vunpack.c.l.b16 %v396
    %v415 = vunpack.c.h.b16 %v396
    %v416 = vunpack.c.l.b16 %v397
    %v417 = vunpack.c.h.b16 %v397
    %v418 = vunpack.c.l.b16 %v398
    %v419 = vunpack.c.h.b16 %v398
    %v420 = vunpack.c.l.b16 %v399
    %v421 = vunpack.c.h.b16 %v399
    %v422 = vunpack.c.l.b16 %v400
    %v423 = vunpack.c.h.b16 %v400
    %v424 = vunpack.c.l.b16 %v401
    %v425 = vunpack.c.h.b16 %v401
    %v426 = vpack.c.b16 %v410, %v410
    %v427 = vpack.c.b16 %v411, %v411
    %v428 = vpack.c.b16 %v412, %v412
    %v429 = vpack.c.b16 %v413, %v413
    %v430 = vpack.c.b16 %v414, %v414
    %v431 = vpack.c.b16 %v415, %v415
    %v432 = vpack.c.b16 %v416, %v416
    %v433 = vpack.c.b16 %v417, %v417
    %v434 = vpack.c.b16 %v418, %v418
    %v435 = vpack.c.b16 %v419, %v419
    %v436 = vpack.c.b16 %v420, %v420
    %v437 = vpack.c.b16 %v421, %v421
    %v438 = vpack.c.b16 %v422, %v422
    %v439 = vpack.c.b16 %v423, %v423
    %v440 = vpack.c.b16 %v424, %v424
    %v441 = vpack.c.b16 %v425, %v425
    %458 = vst [vmem:[#allocation2] sm:$0xf] %v426
    %459 = vst [vmem:[#allocation2 + $0x4] sm:$0xf] %v427
    %460 = vst [vmem:[#allocation2 + $0x8] sm:$0xf] %v428
    %461 = vst [vmem:[#allocation2 + $0xc] sm:$0xf] %v429
    %462 = vst [vmem:[#allocation2 + $0x10] sm:$0xf] %v430
    %463 = vst [vmem:[#allocation2 + $0x14] sm:$0xf] %v431
    %464 = vst [vmem:[#allocation2 + $0x18] sm:$0xf] %v432
    %465 = vst [vmem:[#allocation2 + $0x1c] sm:$0xf] %v433
    %466 = vst [vmem:[#allocation2 + $0x20] sm:$0xf] %v434
    %467 = vst [vmem:[#allocation2 + $0x24] sm:$0xf] %v435
    %468 = vst [vmem:[#allocation2 + $0x28] sm:$0xf] %v436
    %469 = vst [vmem:[#allocation2 + $0x2c] sm:$0xf] %v437
    %470 = vst [vmem:[#allocation2 + $0x30] sm:$0xf] %v438
    %471 = vst [vmem:[#allocation2 + $0x34] sm:$0xf] %v439
    %472 = vst [vmem:[#allocation2 + $0x38] sm:$0xf] %v440
    %473 = vst [vmem:[#allocation2 + $0x3c] sm:$0xf] %v441
    // Predicated region
    $region18: #{tpu_custom_call.1} parent=1 // pred_check
      _
    $region19: #{tpu_custom_call.1} parent=1 // pred_check_branch
      %475 = sbr.rel (0) target = $region21
    $region20: #{tpu_custom_call.1} parent=1 // pred_region
      %s477 = ssub.s32 1024, 1024
      %478 = vsyncadd [#allocation3], %s477
      %s479 = sshll.u32 [#allocation2], 4
      %s480 = int_to_ptr.vmem [resolvable:$true] %s479
      %485 = dma.vmem_to_hbm [thread:$0]  %s480, 1024, %s4, [#allocation3], 64, 64, 4
    $region21: #{tpu_custom_call.1} parent=1 // pred_fallthru
      _
    // Predicated region
    $region22: #{tpu_custom_call.1} parent=1 // pred_check
      _
    $region23: #{tpu_custom_call.1} parent=1 // pred_check_branch
      %487 = sbr.rel (0) target = $region25
    $region24: #{tpu_custom_call.1} parent=1 // pred_region
      _
    $region25: #{tpu_custom_call.1} parent=1 // pred_fallthru
      _
    // Predicated region
    $region26: #{tpu_custom_call.1} parent=1 // pred_check
      _
    $region27: #{tpu_custom_call.1} parent=1 // pred_check_branch
      %489 = sbr.rel (0) target = $region29
    $region28: #{tpu_custom_call.1} parent=1 // pred_region
      _
    $region29: #{tpu_custom_call.1} parent=1 // pred_fallthru
      _
    // Predicated region
    $region30: #{tpu_custom_call.1} parent=1 // pred_check
      _
    $region31: #{tpu_custom_call.1} parent=1 // pred_check_branch
      %491 = sbr.rel (0) target = $region33
    $region32: #{tpu_custom_call.1} parent=1 // pred_region
      %492 = dma.done [#allocation3], 1024
    $region33: #{tpu_custom_call.1} parent=1 // pred_fallthru
      _
    // Predicated region
    $region34: #{tpu_custom_call.1} parent=1 // pred_check
      _
    $region35: #{tpu_custom_call.1} parent=1 // pred_check_branch
      %494 = sbr.rel (0) target = $region37
    $region36: #{tpu_custom_call.1} parent=1 // pred_region
      _
    $region37: #{tpu_custom_call.1} parent=1 // pred_fallthru
      _
    // Predicated region
    $region38: #{tpu_custom_call.1} parent=1 // pred_check
      _
    $region39: #{tpu_custom_call.1} parent=1 // pred_check_branch
      %496 = sbr.rel (0) target = $region41
    $region40: #{tpu_custom_call.1} parent=1 // pred_region
      _
    $region41: #{tpu_custom_call.1} parent=1 // pred_fallthru
      _
    %497 = vsyncpa [#allocation3], 1

</llo_original>
